<compile_context>
chip_gen: v6e
topology: v6e:2x2x1
jax: 0.10.0
libtpu: 0.0.40
codegen_flags: <defaults>
</compile_context>

<pallas_src>
import jax
import jax.numpy as jnp
from jax.experimental import pallas as pl
from jax.experimental.pallas import tpu as pltpu


# ---------------------------------------------------------------------------
# Kernel: identity copy of the current tile.
# ---------------------------------------------------------------------------
def _copy_kernel(x_ref, o_ref):
    o_ref[...] = x_ref[...]


# ---------------------------------------------------------------------------
# Helpers.
# ---------------------------------------------------------------------------
_LANE = 128
_MAX_LANES = 8192            # relaxed cap (perf review): wider contiguous rows
_SMALL_FULLBLOCK_BYTES = 4 * 1024 * 1024


def _resolve_size(size, numel):
    """Resolve a torch-style size tuple (possibly containing -1)."""
    if isinstance(size, int):
        size = (size,)
    size = tuple(int(s) for s in size)
    if -1 in size:
        if numel == 0:
            # Matches torch: the unspecified -1 dimension is ambiguous.
            raise ValueError("cannot infer -1 dimension for a 0-element tensor")
        known = 1
        for s in size:
            if s != -1:
                known *= s
        assert known > 0 and numel % known == 0, (
            "view size incompatible with number of elements")
        size = tuple(numel // known if s == -1 else s for s in size)
    prod = 1
    for s in size:
        prod *= s
    assert prod == numel, "view size incompatible with number of elements"
    return size


def _tile_params():
    """Per-generation (VMEM-capacity-aware) tile byte budget & VMEM limit."""
    vmem = 64 << 20                                  # conservative default (v7x)
    try:
        vmem = int(getattr(pltpu.get_tpu_info(), "vmem_capacity_bytes", vmem))
    except Exception:
        pass
    vmem_limit = min((vmem * 3) // 4, 96 << 20)      # v7x: 48 MiB, v5e/v6e: 96 MiB
    block_bytes = max(2 << 20, min(16 << 20, vmem_limit // 6))
    return block_bytes, vmem_limit                   # 2 in-bufs + 2 out-bufs fit


def _pick_lanes(numel):
    """Widest multiple of 128 (<= _MAX_LANES) that divides numel exactly."""
    best = None
    lanes = _LANE
    while lanes <= _MAX_LANES and lanes <= numel:
        if numel % lanes == 0:
            best = lanes
        lanes += _LANE
    return best


def _pick_rows_per_block(rows, lanes, itemsize, block_bytes):
    """Exact divisor of `rows` near the byte budget (no partial last tile)."""
    sub = max(8, 32 // itemsize)                     # 8 f32 / 16 bf16 / 32 int8
    if rows % sub != 0:
        return rows                                  # full-extent block (legal)
    target = max(sub, block_bytes // (lanes * itemsize))
    q = rows // sub
    best = 1
    d = 1
    while d * d <= q:                                # divisors of q, O(sqrt(q))
        if q % d == 0:
            for cand in (d, q // d):
                if cand * sub <= target and cand > best:
                    best = cand
        d += 1
    rpb = best * sub
    # v7x megacore: prefer >=2 grid steps when the slab is big enough to care.
    if rpb == rows and q % 2 == 0 and rows * lanes * itemsize > (1 << 20):
        rpb = rows // 2
    return rpb


def _slab_copy(slab, block_bytes, vmem_limit):
    """Row-tiled identity copy over a lane-dense (rows, lanes) slab."""
    rows, lanes = slab.shape
    itemsize = jnp.dtype(slab.dtype).itemsize
    rpb = _pick_rows_per_block(rows, lanes, itemsize, block_bytes)
    grid = (rows // rpb,)                            # exact: no masked tail tile
    return pl.pallas_call(
        _copy_kernel,
        out_shape=jax.ShapeDtypeStruct((rows, lanes), slab.dtype),
        grid_spec=pltpu.PrefetchScalarGridSpec(
            num_scalar_prefetch=0,
            grid=grid,
            in_specs=[pl.BlockSpec((rpb, lanes), lambda i: (i, 0))],
            out_specs=pl.BlockSpec((rpb, lanes), lambda i: (i, 0)),
        ),
        compiler_params=pltpu.CompilerParams(
            dimension_semantics=("parallel",),
            vmem_limit_bytes=vmem_limit,
        ),
    )(slab)


def _materialized_copy(x):
    """Pallas identity copy (HBM->VMEM->HBM) through a lane-dense slab."""
    numel = int(x.size)
    itemsize = jnp.dtype(x.dtype).itemsize
    block_bytes, vmem_limit = _tile_params()
    lanes = _pick_lanes(numel)
    if lanes is None:
        if numel * itemsize <= _SMALL_FULLBLOCK_BYTES:
            lanes = numel                            # (1, numel) full block, legal
        else:
            # TODO(synk): huge numel with no factor of 128 — a view is
            # metadata-only anyway, so keep the pure reshape path.
            return x
    slab = jnp.reshape(x, (numel // lanes, lanes))   # metadata-only
    return _slab_copy(slab, block_bytes, vmem_limit)


# ---------------------------------------------------------------------------
# Module.
# ---------------------------------------------------------------------------
class View:
    """JAX/Pallas equivalent of the PyTorch View module.

    Default path is metadata-only (exactly like torch .view()).  Set
    materialize=True to push the bytes through the Pallas identity-copy kernel.
    """

    def __init__(self, size, materialize=False):
        self.size = size
        self.materialize = materialize

    def __call__(self, tensor: jax.Array) -> jax.Array:
        numel = int(tensor.size)
        target = _resolve_size(self.size, numel)
        if not self.materialize or numel == 0:
            # Metadata-only reshape: zero HBM traffic, matches torch semantics.
            return jnp.reshape(tensor, target)
        copied = _materialized_copy(tensor)
        return jnp.reshape(copied, target)           # metadata-only


if __name__ == "__main__":
    key = jax.random.PRNGKey(0)
    # NCHW feature map: (2, 4, 16, 16), the typical use before a Linear.
    x = jax.random.normal(key, (2, 4, 16, 16), dtype=jnp.float32)

    # 1) Default (metadata-only) path — what torch .view() actually does.
    view = View((2, -1))
    y = jax.block_until_ready(view(x))
    ref = jnp.reshape(x, (2, 4 * 16 * 16))
    assert y.shape == (2, 1024), y.shape
    assert y.dtype == x.dtype
    assert bool(jnp.all(y == ref))

    # 2) Materialized path — exercises the Pallas identity-copy kernel (f32).
    ym = jax.block_until_ready(View((2, -1), materialize=True)(x))
    assert ym.shape == (2, 1024)
    assert bool(jnp.all(ym == ref))

    # 3) Materialized path with a packed dtype and a different target shape.
    xb = x.astype(jnp.bfloat16)
    yb = jax.block_until_ready(View((-1, 64), materialize=True)(xb))
    assert yb.shape == (32, 64)
    assert bool(jnp.all(yb == jnp.reshape(xb, (32, 64))))

    # 4) Slightly larger slab to exercise the row-tiled lane-dense path.
    xl = jax.random.normal(key, (64, 4096), dtype=jnp.float32)
    yl = jax.block_until_ready(View((-1,), materialize=True)(xl))
    assert yl.shape == (64 * 4096,)
    assert bool(jnp.all(yl == jnp.reshape(xl, (-1,))))

    print("KERNEL_OK")
</pallas_src>

<mosaic_0001>
module attributes {stable_mosaic.version = 11 : i64} {
  func.func @_copy_kernel(%arg0: i32, %arg1: memref<1x2048xf32, #tpu.memory_space<vmem>>, %arg2: memref<1x2048xf32, #tpu.memory_space<vmem>>) attributes {dimension_semantics = [#tpu.dimension_semantics<parallel>], iteration_bounds = array<i64: 1>, scalar_prefetch = 0 : i64, scratch_operands = 0 : i64, tpu.core_type = #tpu.core_type<tc>, window_params = [{transform_indices = @transform_0, window_bounds = array<i64: 1, 2048>}, {transform_indices = @transform_1, window_bounds = array<i64: 1, 2048>}]} {
    %c0 = arith.constant 0 : index
    %c0_0 = arith.constant 0 : index
    %0 = vector.load %arg1[%c0, %c0_0] : memref<1x2048xf32, #tpu.memory_space<vmem>>, vector<1x2048xf32>
    %c0_1 = arith.constant 0 : index
    %c0_2 = arith.constant 0 : index
    %1 = vector.load %arg2[%c0_1, %c0_2] : memref<1x2048xf32, #tpu.memory_space<vmem>>, vector<1x2048xf32>
    tpu.vector_store %arg2[%c0_1, %c0_2], %0 {strides = array<i32>} : memref<1x2048xf32, #tpu.memory_space<vmem>>, vector<1x2048xf32>,
    return
  }
  func.func @transform_0(%arg0: i32) -> (i32, i32) {
    %c0_i32 = arith.constant 0 : i32
    %c0_i32_0 = arith.constant 0 : i32
    return %arg0, %c0_i32 : i32, i32
  }
  func.func @transform_1(%arg0: i32) -> (i32, i32) {
    %c0_i32 = arith.constant 0 : i32
    %c0_i32_0 = arith.constant 0 : i32
    return %arg0, %c0_i32 : i32, i32
  }
}

</mosaic_0001>

<llo_original>
// kernel: tpu_custom_call.1
$region0: #{tpu_custom_call.1}
  #allocation0 [shape = 'u32[]', space=smem, size = 0x4, offset = 0x4, fixed_abs, tag = 'smem constant byte address 0x4 - core index']
  #allocation1 [shape = 'u32[144,128]{1,0:T(1,128)}', space=vmem, size = 0x12000, scoped, tag = 'internal scratch']
  %s0 = inlined_call_operand.hbm [shape: f32[1,2048], index: 0, kind: input, shape index: {}]
  %s1 = inlined_call_operand.hbm [shape: f32[1,2048], index: 1, kind: output, shape index: {}]
  %s2 = sld [smem:[#allocation0]]
  $region18: #{tpu_custom_call.1} parent=0
    _
  %s4 = ssub.s32 1, %s2
  %s5 = scalar_select 0, %s4, %s2
  $region1: #{tpu_custom_call.1} parent=0
    #allocation2 [shape = 'u8[8192]{0}', space=vmem, size = 0x2000, scoped, tag = 'input window, operand 0, single buffered']
    #allocation3 [shape = 's32[1]{0}', space=sflag, size = 0x4, scoped, tag = 'scoped memory for tpu_custom_call.1']
    #allocation4 [shape = 's32[1]{0}', space=sflag, size = 0x4, scoped, tag = 'scoped memory for tpu_custom_call.1']
    #allocation5 [shape = 'u8[8192]{0}', space=vmem, size = 0x2000, scoped, tag = 'output window, operand 0, single buffered']
    %6 = vsyncpa [#allocation3], 0
    %7 = vsyncpa [#allocation4], 0
    // Predicated region
    $region2: #{tpu_custom_call.1} parent=1 // pred_check
      _
    $region3: #{tpu_custom_call.1} parent=1 // pred_check_branch
      %9 = sbr.rel (0) target = $region5
    $region4: #{tpu_custom_call.1} parent=1 // pred_region
      %s11 = ssub.s32 256, 256
      %12 = vsyncadd [#allocation3], %s11
      %s14 = sshll.u32 [#allocation2], 4
      %s15 = int_to_ptr.vmem [resolvable:$true] %s14
      %17 = dma.hbm_to_vmem [thread:$0]  %s0, 256, %s15, [#allocation3]
    $region5: #{tpu_custom_call.1} parent=1 // pred_fallthru
      _
    // Predicated region
    $region6: #{tpu_custom_call.1} parent=1 // pred_check
      _
    $region7: #{tpu_custom_call.1} parent=1 // pred_check_branch
      %19 = sbr.rel (0) target = $region9
    $region8: #{tpu_custom_call.1} parent=1 // pred_region
      %20 = dma.done [#allocation3], 256
    $region9: #{tpu_custom_call.1} parent=1 // pred_fallthru
      _
    %v21 = vld [vmem:[#allocation2] sm:$0xff]
    %v22 = vld [vmem:[#allocation2 + $0x8] sm:$0xff]
    %23 = vst [vmem:[#allocation5] sm:$0xff] %v21
    %24 = vst [vmem:[#allocation5 + $0x8] sm:$0xff] %v22
    // Predicated region
    $region10: #{tpu_custom_call.1} parent=1 // pred_check
      _
    $region11: #{tpu_custom_call.1} parent=1 // pred_check_branch
      %26 = sbr.rel (0) target = $region13
    $region12: #{tpu_custom_call.1} parent=1 // pred_region
      %s28 = ssub.s32 256, 256
      %29 = vsyncadd [#allocation4], %s28
      %s31 = sshll.u32 [#allocation5], 4
      %s32 = int_to_ptr.vmem [resolvable:$true] %s31
      %34 = dma.vmem_to_hbm [thread:$0]  %s32, 256, %s1, [#allocation4]
    $region13: #{tpu_custom_call.1} parent=1 // pred_fallthru
      _
    // Predicated region
    $region14: #{tpu_custom_call.1} parent=1 // pred_check
      _
    $region15: #{tpu_custom_call.1} parent=1 // pred_check_branch
      %36 = sbr.rel (0) target = $region17
    $region16: #{tpu_custom_call.1} parent=1 // pred_region
      %37 = dma.done [#allocation4], 256
    $region17: #{tpu_custom_call.1} parent=1 // pred_fallthru
      _
    %38 = vsyncpa [#allocation3], 1
    %39 = vsyncpa [#allocation4], 1

</llo_original>
